<compile_context>
chip_gen: v5e
topology: v5e:2x2
jax: 0.10.0
libtpu: 0.0.40
codegen_flags: <defaults>
</compile_context>

<pallas_src>
import functools

import jax
import jax.numpy as jnp
from jax.experimental import pallas as pl
from jax.experimental.pallas import tpu as pltpu


def _round_up(x, m):
    return (x + m - 1) // m * m


# ------------------------------ Pallas kernel --------------------------------


def gcn_layer_kernel(adj_ref, x_ref, dinv_ref, w_ref, b_ref, out_ref, acc_ref,
                     *, apply_relu, scale_out, x_resident, tile_k):
    """One GCN layer row-tile: accumulate A_hat_tile @ X_tile, finalize with
    D^-1/2 row scaling, weight transform, bias, ReLU (and optional output
    pre-scaling for the next layer)."""
    k = pl.program_id(1)

    @pl.when(k == 0)
    def _init():
        acc_ref[...] = jnp.zeros_like(acc_ref)

    # int8 0/1/count adjacency pattern -> bf16 (exact) on the VPU, then MXU.
    a = adj_ref[...].astype(jnp.bfloat16)
    if x_resident:
        start = pl.multiple_of(k * tile_k, tile_k)
        xt = x_ref[pl.ds(start, tile_k), :]
    else:
        xt = x_ref[...]
    acc_ref[...] += jnp.dot(a, xt, preferred_element_type=jnp.float32)

    @pl.when(k == pl.num_programs(1) - 1)
    def _finalize():
        # Fold the D^-1/2 row scaling here instead of into the adjacency values.
        agg = acc_ref[...] * dinv_ref[...]
        h = jnp.dot(agg.astype(jnp.bfloat16), w_ref[...],
                    preferred_element_type=jnp.float32) + b_ref[...]
        if apply_relu:
            h = jnp.maximum(h, 0.0)
        if scale_out:
            # Pre-apply the next layer's D^-1/2 column scaling to this output.
            h = h * dinv_ref[...]
        out_ref[...] = h.astype(out_ref.dtype)


def gcn_layer_pallas(adj_i8, x, dinv_col, w, b, *, apply_relu, scale_out,
                     out_dtype, tile_m, tile_k, n_p):
    f_in = x.shape[1]
    f_out = w.shape[1]
    grid = (n_p // tile_m, n_p // tile_k)
    out_itemsize = jnp.dtype(out_dtype).itemsize

    # Keep the feature strip fully VMEM-resident when small: removes the
    # (n_p / tile_m)-fold re-read of X/H from HBM.
    x_resident = (2 * n_p * f_in * 2) <= (8 * 1024 * 1024)
    if x_resident:
        x_spec = pl.BlockSpec((n_p, f_in), lambda i, k: (0, 0))
    else:
        x_spec = pl.BlockSpec((tile_k, f_in), lambda i, k: (k, 0))

    # VMEM budget estimate (double-buffered inputs/outputs + f32 accumulator).
    est = (2 * tile_m * tile_k                                   # int8 adj
           + (2 * n_p * f_in * 2 if x_resident else 2 * tile_k * f_in * 2)
           + 2 * f_in * f_out * 2                                # bf16 W
           + 2 * 8 * f_out * 4                                   # bias
           + 2 * tile_m * 128 * 4                                # dinv (lane-pad)
           + 2 * tile_m * f_out * out_itemsize                   # output
           + tile_m * f_in * 4)                                  # accumulator
    vmem_limit = min(48 * 1024 * 1024,                            # v7x-safe cap
                     max(32 * 1024 * 1024, int(est * 1.25) + (4 << 20)))

    flops = 2 * n_p * n_p * f_in + 2 * n_p * f_in * f_out
    x_bytes = n_p * f_in * 2 if x_resident else grid[0] * n_p * f_in * 2
    bytes_accessed = (n_p * n_p                                   # int8 adjacency
                      + x_bytes
                      + n_p * 4                                   # dinv
                      + f_in * f_out * 2 + f_out * 4              # W, b
                      + n_p * f_out * out_itemsize)               # output

    kernel = functools.partial(gcn_layer_kernel, apply_relu=apply_relu,
                               scale_out=scale_out, x_resident=x_resident,
                               tile_k=tile_k)
    # NOTE: on v7x with small tiles, pipeline_mode=pl.Buffered(3) on the
    # adjacency spec could hide DMA issue latency; omitted (bigger tiles are
    # the primary lever).
    return pl.pallas_call(
        kernel,
        out_shape=jax.ShapeDtypeStruct((n_p, f_out), out_dtype),
        grid_spec=pltpu.PrefetchScalarGridSpec(
            num_scalar_prefetch=0,
            grid=grid,
            in_specs=[
                pl.BlockSpec((tile_m, tile_k), lambda i, k: (i, k)),  # A+I tile
                x_spec,                                               # X / H
                pl.BlockSpec((tile_m, 1), lambda i, k: (i, 0)),       # D^-1/2 rows
                pl.BlockSpec((f_in, f_out), lambda i, k: (0, 0)),     # W (resident)
                pl.BlockSpec((1, f_out), lambda i, k: (0, 0)),        # bias
            ],
            out_specs=pl.BlockSpec((tile_m, f_out), lambda i, k: (i, 0)),
            scratch_shapes=[pltpu.VMEM((tile_m, f_in), jnp.float32)],
        ),
        compiler_params=pltpu.CompilerParams(
            dimension_semantics=("parallel", "arbitrary"),
            vmem_limit_bytes=vmem_limit,
        ),
        cost_estimate=pl.CostEstimate(
            flops=flops, transcendentals=0, bytes_accessed=bytes_accessed),
    )(adj_i8, x, dinv_col, w, b)


# ------------------------------- JAX glue ------------------------------------


def build_graph_operands(edge_index, num_nodes, n_pad):
    """Build A_hat = A + I directly as a zero-padded int8 pattern plus D^-1/2.

    PyG gcn_norm semantics: edge multiplicity counted via scatter-add, exactly
    one self-loop per node (add_remaining_self_loops), deg = row sums.
    edge_index: (2, E) int32, row 0 = source, row 1 = target; A_hat[dst, src].
    """
    src, dst = edge_index[0], edge_index[1]
    adj = jnp.zeros((n_pad, n_pad), jnp.int8)
    # int8 is exact for edge multiplicities up to 127 (far above typical).
    adj = adj.at[dst, src].add(jnp.ones(src.shape, jnp.int8))
    node = jnp.arange(num_nodes)
    adj = adj.at[node, node].set(jnp.int8(1))      # exactly one self-loop/node
    deg = jnp.sum(adj, axis=1).astype(jnp.float32)
    dinv = jnp.where(deg > 0, jax.lax.rsqrt(jnp.maximum(deg, 1.0)), 0.0)
    return adj, dinv


def glorot(key, shape):
    fan_in, fan_out = shape
    limit = jnp.sqrt(6.0 / (fan_in + fan_out))
    return jax.random.uniform(key, shape, jnp.float32, -limit, limit)


def gcn_apply(x, edge_index, params, *, tile=2048):
    """Mirrors GCN.forward semantics (inference mode)."""
    if x.ndim == 1:
        x = x[:, None]
    if edge_index.size == 0:
        return x                                   # matches the module's early return
    x = x.astype(jnp.float32)
    w1, b1, w2, b2 = params
    n, f_in = x.shape
    hid = w1.shape[1]
    f_out = w2.shape[1]

    # Lane-dense 128 padding for feature dims.
    f_in_p = _round_up(f_in, 128)
    hid_p = _round_up(hid, 128)
    f_out_p = _round_up(f_out, 128)

    # Square tile (same for rows and contraction -> no lcm padding blowup),
    # capped at 2048 for v7x's 64 MiB VMEM and clamped so there are >= 2 row
    # tiles when possible (v7x dual-TensorCore "parallel" axis).
    n_128 = _round_up(n, 128)
    t = min(_round_up(tile, 128), n_128, 2048)
    if n_128 >= 256:
        t = min(t, max(128, (n_128 // 2) // 128 * 128))
    n_p = _round_up(n, t)

    # A+I pattern built directly in padded int8 (no dense f32 N^2 pass),
    # D^-1/2 kept as a separate vector.
    adj_i8, dinv = build_graph_operands(edge_index, n, n_p)
    dinv_col = dinv.reshape(n_p, 1)

    # Pre-scale X by D^-1/2 (the column scaling folded out of the adjacency),
    # zero-pad, cast to bf16.
    x_p = jnp.zeros((n_p, f_in_p), jnp.float32).at[:n, :f_in].set(dinv[:n, None] * x)
    x_p = x_p.astype(jnp.bfloat16)

    w1_p = jnp.zeros((f_in_p, hid_p), jnp.float32).at[:f_in, :hid].set(w1).astype(jnp.bfloat16)
    b1_p = jnp.zeros((1, hid_p), jnp.float32).at[0, :hid].set(b1)
    w2_p = jnp.zeros((hid_p, f_out_p), jnp.float32).at[:hid, :f_out].set(w2).astype(jnp.bfloat16)
    b2_p = jnp.zeros((1, f_out_p), jnp.float32).at[0, :f_out].set(b2)

    # Layer 1: D^-1/2 * relu( D^-1/2 (A+I) (D^-1/2 X) W1 + b1 ), bf16 output
    # already carrying layer 2's column scaling.
    h = gcn_layer_pallas(adj_i8, x_p, dinv_col, w1_p, b1_p, apply_relu=True,
                         scale_out=True, out_dtype=jnp.bfloat16,
                         tile_m=t, tile_k=t, n_p=n_p)
    # F.dropout(training=False) is identity at inference.
    # TODO(synk): training-mode dropout (pltpu.prng_random_bits mask) not emitted.
    # Layer 2: D^-1/2 (A+I) H_scaled W2 + b2, f32 output.
    out = gcn_layer_pallas(adj_i8, h, dinv_col, w2_p, b2_p, apply_relu=False,
                           scale_out=False, out_dtype=jnp.float32,
                           tile_m=t, tile_k=t, n_p=n_p)
    return out[:n, :f_out]


if __name__ == "__main__":
    # Small, deterministic problem: 200 nodes, input_dim=8, hidden_dim=32, out=16.
    N, INPUT_DIM, HIDDEN_DIM, OUTPUT_DIM = 200, 8, 32, 16

    key = jax.random.PRNGKey(0)
    kx, ke, kw1, kw2 = jax.random.split(key, 4)

    x = jax.random.normal(kx, (N, INPUT_DIM), jnp.float32)

    # Deterministic random directed edges (2, E).
    E = 600
    edge_index = jax.random.randint(ke, (2, E), 0, N, dtype=jnp.int32)

    w1 = glorot(kw1, (INPUT_DIM, HIDDEN_DIM))
    b1 = jnp.zeros((HIDDEN_DIM,), jnp.float32)
    w2 = glorot(kw2, (HIDDEN_DIM, OUTPUT_DIM))
    b2 = jnp.zeros((OUTPUT_DIM,), jnp.float32)
    params = (w1, b1, w2, b2)

    # Tile auto-clamps to 128 at this size: N=200 -> padded 256, grid (2, 2).
    out = gcn_apply(x, edge_index, params)
    jax.block_until_ready(out)
    assert out.shape == (N, OUTPUT_DIM)

    mm = functools.partial(jnp.matmul, precision=jax.lax.Precision.HIGHEST)
    adj_i8, dinv = build_graph_operands(edge_index, N, N)
    adj_f = adj_i8.astype(jnp.float32)
    a_norm = dinv[:, None] * adj_f * dinv[None, :]

    # (a) Reference emulating the kernel's bf16-operand / f32-accumulate numerics
    #     and its dinv-folding / rounding points.
    bf = lambda a: a.astype(jnp.bfloat16).astype(jnp.float32)
    xs = bf(dinv[:, None] * x)
    agg1 = bf(dinv[:, None] * mm(adj_f, xs))
    h1 = jnp.maximum(mm(agg1, bf(w1)) + b1, 0.0)
    h1s = bf(dinv[:, None] * h1)
    agg2 = bf(dinv[:, None] * mm(adj_f, h1s))
    o_emu = mm(agg2, bf(w2)) + b2
    assert jnp.allclose(out, o_emu, atol=5e-3, rtol=5e-3), (
        float(jnp.max(jnp.abs(out - o_emu))))

    # (b) Loose check against the exact f32 math of the PyTorch module.
    h_ref = jnp.maximum(mm(a_norm, mm(x, w1)) + b1, 0.0)
    o_ref = mm(a_norm, mm(h_ref, w2)) + b2
    assert jnp.allclose(out, o_ref, atol=5e-2, rtol=5e-2), (
        float(jnp.max(jnp.abs(out - o_ref))))

    print("KERNEL_OK")
</pallas_src>

<mosaic_0001>
module attributes {stable_mosaic.version = 11 : i64} {
  func.func @gcn_layer_kernel(%arg0: i32, %arg1: i32, %arg2: memref<128x128xi8, #tpu.memory_space<vmem>>, %arg3: memref<256x128xbf16, #tpu.memory_space<vmem>>, %arg4: memref<128x1xf32, #tpu.memory_space<vmem>>, %arg5: memref<128x128xbf16, #tpu.memory_space<vmem>>, %arg6: memref<1x128xf32, #tpu.memory_space<vmem>>, %arg7: memref<128x128xbf16, #tpu.memory_space<vmem>>, %arg8: memref<128x128xf32, #tpu.memory_space<vmem>>) attributes {dimension_semantics = [#tpu.dimension_semantics<parallel>, #tpu.dimension_semantics<arbitrary>], iteration_bounds = array<i64: 2, 2>, scalar_prefetch = 0 : i64, scratch_operands = 1 : i64, tpu.core_type = #tpu.core_type<tc>, window_params = [{transform_indices = @transform_0, window_bounds = array<i64: 128, 128>}, {pipeline_mode = #tpu.pipeline_mode<synchronous>, transform_indices = @transform_1, window_bounds = array<i64: 256, 128>}, {transform_indices = @transform_2, window_bounds = array<i64: 128, 1>}, {pipeline_mode = #tpu.pipeline_mode<synchronous>, transform_indices = @transform_3, window_bounds = array<i64: 128, 128>}, {pipeline_mode = #tpu.pipeline_mode<synchronous>, transform_indices = @transform_4, window_bounds = array<i64: 1, 128>}, {transform_indices = @transform_5, window_bounds = array<i64: 128, 128>}]} {
    %c0_i32 = arith.constant 0 : i32
    %0 = arith.cmpi eq, %arg1, %c0_i32 : i32
    %1 = arith.extui %0 : i1 to i32
    %c0_i32_0 = arith.constant 0 : i32
    %2 = arith.cmpi ne, %1, %c0_i32_0 : i32
    scf.if %2 {
      %cst_8 = arith.constant 0.000000e+00 : f32
      %16 = vector.broadcast %cst_8 : f32 to vector<128x128xf32>
      %c0_9 = arith.constant 0 : index
      %c0_10 = arith.constant 0 : index
      %17 = vector.load %arg8[%c0_9, %c0_10] : memref<128x128xf32, #tpu.memory_space<vmem>>, vector<128x128xf32>
      tpu.vector_store %arg8[%c0_9, %c0_10], %16 {strides = array<i32>} : memref<128x128xf32, #tpu.memory_space<vmem>>, vector<128x128xf32>,
    } else {
    }
    %c0 = arith.constant 0 : index
    %c0_1 = arith.constant 0 : index
    %3 = vector.load %arg2[%c0, %c0_1] : memref<128x128xi8, #tpu.memory_space<vmem>>, vector<128x128xi8>
    %4 = arith.sitofp %3 : vector<128x128xi8> to vector<128x128xbf16>
    %c128_i32 = arith.constant 128 : i32
    %5 = arith.muli %arg1, %c128_i32 : i32
    %6 = tpu.assume_multiple %5, 128 : i32
    %7 = arith.index_cast %6 : i32 to index
    %c0_2 = arith.constant 0 : index
    %8 = vector.load %arg3[%7, %c0_2] : memref<256x128xbf16, #tpu.memory_space<vmem>>, vector<128x128xbf16>
    %c0_3 = arith.constant 0 : index
    %c0_4 = arith.constant 0 : index
    %9 = vector.load %arg8[%c0_3, %c0_4] : memref<128x128xf32, #tpu.memory_space<vmem>>, vector<128x128xf32>
    %cst = arith.constant dense<0.000000e+00> : vector<128x128xf32>
    %10 = tpu.matmul %4, %8, %cst {dimension_numbers = #tpu.dot_dimension_numbers<[1], [0], [0], [1], [0, 0, 1, 1], [], []>} : vector<128x128xbf16>, vector<128x128xbf16>, vector<128x128xf32> -> vector<128x128xf32>
    %11 = arith.addf %9, %10 : vector<128x128xf32>
    %c0_5 = arith.constant 0 : index
    %c0_6 = arith.constant 0 : index
    %12 = vector.load %arg8[%c0_5, %c0_6] : memref<128x128xf32, #tpu.memory_space<vmem>>, vector<128x128xf32>
    tpu.vector_store %arg8[%c0_5, %c0_6], %11 {strides = array<i32>} : memref<128x128xf32, #tpu.memory_space<vmem>>, vector<128x128xf32>,
    %c1_i32 = arith.constant 1 : i32
    %13 = arith.cmpi eq, %arg1, %c1_i32 : i32
    %14 = arith.extui %13 : i1 to i32
    %c0_i32_7 = arith.constant 0 : i32
    %15 = arith.cmpi ne, %14, %c0_i32_7 : i32
    scf.if %15 {
      %c0_8 = arith.constant 0 : index
      %c0_9 = arith.constant 0 : index
      %16 = vector.load %arg8[%c0_8, %c0_9] : memref<128x128xf32, #tpu.memory_space<vmem>>, vector<128x128xf32>
      %c0_10 = arith.constant 0 : index
      %c0_11 = arith.constant 0 : index
      %17 = vector.load %arg4[%c0_10, %c0_11] : memref<128x1xf32, #tpu.memory_space<vmem>>, vector<128x1xf32>
      %18 = vector.broadcast %17 : vector<128x1xf32> to vector<128x128xf32>
      %19 = arith.mulf %16, %18 : vector<128x128xf32>
      %20 = arith.truncf %19 : vector<128x128xf32> to vector<128x128xbf16>
      %c0_12 = arith.constant 0 : index
      %c0_13 = arith.constant 0 : index
      %21 = vector.load %arg5[%c0_12, %c0_13] : memref<128x128xbf16, #tpu.memory_space<vmem>>, vector<128x128xbf16>
      %cst_14 = arith.constant dense<0.000000e+00> : vector<128x128xf32>
      %22 = tpu.matmul %20, %21, %cst_14 {dimension_numbers = #tpu.dot_dimension_numbers<[1], [0], [0], [1], [0, 0, 1, 1], [], []>} : vector<128x128xbf16>, vector<128x128xbf16>, vector<128x128xf32> -> vector<128x128xf32>
      %c0_15 = arith.constant 0 : index
      %c0_16 = arith.constant 0 : index
      %23 = vector.load %arg6[%c0_15, %c0_16] : memref<1x128xf32, #tpu.memory_space<vmem>>, vector<1x128xf32>
      %24 = vector.broadcast %23 : vector<1x128xf32> to vector<128x128xf32>
      %25 = arith.addf %22, %24 : vector<128x128xf32>
      %cst_17 = arith.constant 0.000000e+00 : f32
      %26 = vector.broadcast %cst_17 : f32 to vector<128x128xf32>
      %27 = arith.maximumf %25, %26 : vector<128x128xf32>
      %c0_18 = arith.constant 0 : index
      %c0_19 = arith.constant 0 : index
      %28 = vector.load %arg4[%c0_18, %c0_19] : memref<128x1xf32, #tpu.memory_space<vmem>>, vector<128x1xf32>
      %29 = vector.broadcast %28 : vector<128x1xf32> to vector<128x128xf32>
      %30 = arith.mulf %27, %29 : vector<128x128xf32>
      %31 = arith.truncf %30 : vector<128x128xf32> to vector<128x128xbf16>
      %c0_20 = arith.constant 0 : index
      %c0_21 = arith.constant 0 : index
      %32 = vector.load %arg7[%c0_20, %c0_21] : memref<128x128xbf16, #tpu.memory_space<vmem>>, vector<128x128xbf16>
      tpu.vector_store %arg7[%c0_20, %c0_21], %31 {strides = array<i32>} : memref<128x128xbf16, #tpu.memory_space<vmem>>, vector<128x128xbf16>,
    } else {
    }
    return
  }
  func.func @transform_0(%arg0: i32, %arg1: i32) -> (i32, i32) {
    %c0_i32 = arith.constant 0 : i32
    return %arg0, %arg1 : i32, i32
  }
  func.func @transform_1(%arg0: i32, %arg1: i32) -> (i32, i32) {
    %c0_i32 = arith.constant 0 : i32
    %c0_i32_0 = arith.constant 0 : i32
    %c0_i32_1 = arith.constant 0 : i32
    return %c0_i32, %c0_i32_0 : i32, i32
  }
  func.func @transform_2(%arg0: i32, %arg1: i32) -> (i32, i32) {
    %c0_i32 = arith.constant 0 : i32
    %c0_i32_0 = arith.constant 0 : i32
    return %arg0, %c0_i32 : i32, i32
  }
  func.func @transform_3(%arg0: i32, %arg1: i32) -> (i32, i32) {
    %c0_i32 = arith.constant 0 : i32
    %c0_i32_0 = arith.constant 0 : i32
    %c0_i32_1 = arith.constant 0 : i32
    return %c0_i32, %c0_i32_0 : i32, i32
  }
  func.func @transform_4(%arg0: i32, %arg1: i32) -> (i32, i32) {
    %c0_i32 = arith.constant 0 : i32
    %c0_i32_0 = arith.constant 0 : i32
    %c0_i32_1 = arith.constant 0 : i32
    return %c0_i32, %c0_i32_0 : i32, i32
  }
  func.func @transform_5(%arg0: i32, %arg1: i32) -> (i32, i32) {
    %c0_i32 = arith.constant 0 : i32
    %c0_i32_0 = arith.constant 0 : i32
    return %arg0, %c0_i32 : i32, i32
  }
}

</mosaic_0001>

<llo_original>
// kernel: tpu_custom_call.1
$region0: #{tpu_custom_call.1}
  #allocation0 [shape = 'u32[]', space=smem, size = 0x4, offset = 0x4, fixed_abs, tag = 'smem constant byte address 0x4 - core index']
  #allocation1 [shape = 'u32[72,128]{1,0:T(1,128)}', space=vmem, size = 0x9000, scoped, tag = 'internal scratch']
  #allocation2 [shape = 'f32[128,128]{1,0:T(8,128)}', space=vmem, size = 0x10000, scoped, tag = 'scratch operand']
  %s0 = inlined_call_operand.vmem [shape: s8[256,256], index: 0, kind: input, shape index: {}]
  %s1 = inlined_call_operand.vmem [shape: bf16[256,128], index: 1, kind: input, shape index: {}]
  %s2 = inlined_call_operand.vmem [shape: f32[256,1], index: 2, kind: input, shape index: {}]
  %s3 = inlined_call_operand.hbm [shape: bf16[128,128], index: 3, kind: input, shape index: {}]
  %s4 = inlined_call_operand.vmem [shape: f32[1,128], index: 4, kind: input, shape index: {}]
  %s5 = inlined_call_operand.hbm [shape: bf16[256,128], index: 5, kind: output, shape index: {}]
  %s6 = sld [smem:[#allocation0]]
  $region103: #{tpu_custom_call.1} parent=0
    _
  %s8 = ssub.s32 1, %s6
  %s9 = scalar_select 0, %s8, %s6
  $region1: #{tpu_custom_call.1} parent=0
    #allocation3 [shape = 'u8[32768]{0}', space=vmem, size = 0x8000, scoped, tag = 'input window, operand 0']
    #allocation4 [shape = 'u8[32768]{0}', space=vmem, size = 0x8000, scoped, tag = 'input window, operand 3, single buffered']
    #allocation5 [shape = 's32[2]{0}', space=sflag, size = 0x8, scoped, tag = 'scoped memory for tpu_custom_call.1']
    #allocation6 [shape = 's32[2]{0}', space=sflag, size = 0x8, scoped, tag = 'scoped memory for tpu_custom_call.1']
    #allocation7 [shape = 'u8[65536]{0}', space=vmem, size = 0x10000, scoped, tag = 'output window, operand 0']
    %10 = vsyncpa [#allocation5], 0
    %11 = vsyncpa [#allocation6], 0
    %s12 = scalar_lea.sflag [#allocation6], 1
    %13 = vsyncpa %s12, 0
    loop: start=0, step=1, limit=6
    $region2: #{tpu_custom_call.1} parent=1 // loop_pre_header
      _
    $region3: #{tpu_custom_call.1} parent=1 // loop_header
      %s15 = sphi 0, %s19
      %p16 = scmp.ge.s32.totalorder %s15, 6
      %s22 = sphi 0, %s34
      %s23 = sphi 0, %s30
      %s24 = sphi 0, %s22
      %s25 = sphi 0, %s23
      %s26 = sphi 0, %s24
      %s27 = sphi 0, %s25
      %s39 = sphi 0, %s41
      %s42 = sphi 0, %s39
      %s43 = sphi 0, %s42
      %s59 = sphi 0, %s43
      %s63 = sphi 0, %s63
      %s65 = sphi 0, %s63
      %s66 = sphi 0, %s65
      %s80 = sphi 0, %s66
      %s86 = sphi 0, %s88
      %s89 = sphi 0, %s86
      %s90 = sphi 0, %s89
      %s106 = sphi 0, %s90
      %s110 = sphi 0, %s110
      %s112 = sphi 0, %s110
      %s113 = sphi 0, %s112
      %s127 = sphi 0, %s113
      %s131 = sphi 0, %s131
      %s133 = sphi 0, %s131
      %s134 = sphi 0, %s133
      %s148 = sphi 0, %s134
      %s154 = sphi 0, %s156
      %s157 = sphi 0, %s154
      %s158 = sphi 0, %s157
      %s174 = sphi 0, %s158
    $region4: #{tpu_custom_call.1} parent=1 // loop_header_branch
      %18 = sbr.rel (%p16) target = $region8
    $region5: #{tpu_custom_call.1} parent=1 // loop_body
      %s20 = ssub.s32 %s15, 1
      %s21 = ssub.s32 %s15, 2
      %s28 = sadd.s32 1, %s23
      %p29 = scmp.ge.s32.totalorder %s28, 2
      %s30 = scalar_select %p29, 0, %s28
      %s31 = sadd.s32 1, %s22
      %s32 = scalar_select %p29, %s31, %s22
      %p33 = scmp.ge.s32.totalorder %s32, 2
      %s34 = scalar_select %p33, 0, %s32
      %s35 = ssub.s32 %s22, %s34
      %s36 = ssub.s32 %s23, %s30
      %s37 = sor.u32 %s35, %s36
      %p38 = scmp.eq.s32.totalorder %s37, 0
      %s40 = sadd.s32 %s39, 1
      %s41 = scalar_select %p38, %s39, %s40
      %p44 = pneg %p38
      %p45 = scmp.eq.s32.totalorder %s15, 3
      %p46 = por %p44, %p45
      %p47 = scmp.ne.s32.totalorder %s39, %s42
      %p48 = scmp.eq.s32.totalorder %s15, 0
      %p49 = por %p47, %p48
      %p50 = scmp.ne.s32.totalorder %s39, %s42
      %p51 = scmp.eq.s32.totalorder %s20, 3
      %p52 = por %p50, %p51
      %p53 = scmp.ne.s32.totalorder %s42, %s43
      %p54 = scmp.eq.s32.totalorder %s20, 0
      %p55 = por %p53, %p54
      %p56 = scmp.ne.s32.totalorder %s42, %s43
      %p57 = scmp.eq.s32.totalorder %s21, 3
      %p58 = por %p56, %p57
      %p60 = scmp.ne.s32.totalorder %s43, %s59
      %p61 = scmp.eq.s32.totalorder %s21, 0
      %p62 = por %p60, %p61
      %s64 = sadd.s32 %s63, 1
      %p67 = scmp.eq.s32.totalorder %s15, 3
      %p68 = scmp.ne.s32.totalorder %s63, %s65
      %p69 = scmp.eq.s32.totalorder %s15, 0
      %p70 = por %p68, %p69
      %p71 = scmp.ne.s32.totalorder %s63, %s65
      %p72 = scmp.eq.s32.totalorder %s20, 3
      %p73 = por %p71, %p72
      %p74 = scmp.ne.s32.totalorder %s65, %s66
      %p75 = scmp.eq.s32.totalorder %s20, 0
      %p76 = por %p74, %p75
      %p77 = scmp.ne.s32.totalorder %s65, %s66
      %p78 = scmp.eq.s32.totalorder %s21, 3
      %p79 = por %p77, %p78
      %p81 = scmp.ne.s32.totalorder %s66, %s80
      %p82 = scmp.eq.s32.totalorder %s21, 0
      %p83 = por %p81, %p82
      %s84 = ssub.s32 %s22, %s34
      %p85 = scmp.eq.s32.totalorder %s84, 0
      %s87 = sadd.s32 %s86, 1
      %s88 = scalar_select %p85, %s86, %s87
      %p91 = pneg %p85
      %p92 = scmp.eq.s32.totalorder %s15, 3
      %p93 = por %p91, %p92
      %p94 = scmp.ne.s32.totalorder %s86, %s89
      %p95 = scmp.eq.s32.totalorder %s15, 0
      %p96 = por %p94, %p95
      %p97 = scmp.ne.s32.totalorder %s86, %s89
      %p98 = scmp.eq.s32.totalorder %s20, 3
      %p99 = por %p97, %p98
      %p100 = scmp.ne.s32.totalorder %s89, %s90
      %p101 = scmp.eq.s32.totalorder %s20, 0
      %p102 = por %p100, %p101
      %p103 = scmp.ne.s32.totalorder %s89, %s90
      %p104 = scmp.eq.s32.totalorder %s21, 3
      %p105 = por %p103, %p104
      %p107 = scmp.ne.s32.totalorder %s90, %s106
      %p108 = scmp.eq.s32.totalorder %s21, 0
      %p109 = por %p107, %p108
      %s111 = sadd.s32 %s110, 1
      %p114 = scmp.eq.s32.totalorder %s15, 3
      %p115 = scmp.ne.s32.totalorder %s110, %s112
      %p116 = scmp.eq.s32.totalorder %s15, 0
      %p117 = por %p115, %p116
      %p118 = scmp.ne.s32.totalorder %s110, %s112
      %p119 = scmp.eq.s32.totalorder %s20, 3
      %p120 = por %p118, %p119
      %p121 = scmp.ne.s32.totalorder %s112, %s113
      %p122 = scmp.eq.s32.totalorder %s20, 0
      %p123 = por %p121, %p122
      %p124 = scmp.ne.s32.totalorder %s112, %s113
      %p125 = scmp.eq.s32.totalorder %s21, 3
      %p126 = por %p124, %p125
      %p128 = scmp.ne.s32.totalorder %s113, %s127
      %p129 = scmp.eq.s32.totalorder %s21, 0
      %p130 = por %p128, %p129
      %s132 = sadd.s32 %s131, 1
      %p135 = scmp.eq.s32.totalorder %s15, 3
      %p136 = scmp.ne.s32.totalorder %s131, %s133
      %p137 = scmp.eq.s32.totalorder %s15, 0
      %p138 = por %p136, %p137
      %p139 = scmp.ne.s32.totalorder %s131, %s133
      %p140 = scmp.eq.s32.totalorder %s20, 3
      %p141 = por %p139, %p140
      %p142 = scmp.ne.s32.totalorder %s133, %s134
      %p143 = scmp.eq.s32.totalorder %s20, 0
      %p144 = por %p142, %p143
      %p145 = scmp.ne.s32.totalorder %s133, %s134
      %p146 = scmp.eq.s32.totalorder %s21, 3
      %p147 = por %p145, %p146
      %p149 = scmp.ne.s32.totalorder %s134, %s148
      %p150 = scmp.eq.s32.totalorder %s21, 0
      %p151 = por %p149, %p150
      %s152 = ssub.s32 %s22, %s34
      %p153 = scmp.eq.s32.totalorder %s152, 0
      %s155 = sadd.s32 %s154, 1
      %s156 = scalar_select %p153, %s154, %s155
      %p159 = pneg %p153
      %p160 = scmp.eq.s32.totalorder %s15, 3
      %p161 = por %p159, %p160
      %p162 = scmp.ne.s32.totalorder %s154, %s157
      %p163 = scmp.eq.s32.totalorder %s15, 0
      %p164 = por %p162, %p163
      %p165 = scmp.ne.s32.totalorder %s154, %s157
      %p166 = scmp.eq.s32.totalorder %s20, 3
      %p167 = por %p165, %p166
      %p168 = scmp.ne.s32.totalorder %s157, %s158
      %p169 = scmp.eq.s32.totalorder %s20, 0
      %p170 = por %p168, %p169
      %p171 = scmp.ne.s32.totalorder %s157, %s158
      %p172 = scmp.eq.s32.totalorder %s21, 3
      %p173 = por %p171, %p172
      %p175 = scmp.ne.s32.totalorder %s158, %s174
      %p176 = scmp.eq.s32.totalorder %s21, 0
      %p177 = por %p175, %p176
      %p178 = scmp.le.s32.totalorder 1, %s15
      %p179 = scmp.lt.s32.totalorder %s15, 5
      %p180 = pnand %p178, %p179
      %p181 = pneg %p180
      // Predicated region
      $region9: #{tpu_custom_call.1} parent=5 // pred_check
        _
      $region10: #{tpu_custom_call.1} parent=5 // pred_check_branch
        %183 = sbr.rel (%p180) target = $region12
      $region11: #{tpu_custom_call.1} parent=5 // pred_region
        %s184 = ssub.s32 %s15, 1
        // Predicated region
        $region13: #{tpu_custom_call.1} parent=11 // pred_check
          %p185 = pneg %p76
        $region14: #{tpu_custom_call.1} parent=11 // pred_check_branch
          %187 = sbr.rel (%p185) target = $region16
        $region15: #{tpu_custom_call.1} parent=11 // pred_region
          _
        $region16: #{tpu_custom_call.1} parent=11 // pred_fallthru
          _
        // Predicated region
        $region17: #{tpu_custom_call.1} parent=11 // pred_check
          %p188 = pneg %p123
        $region18: #{tpu_custom_call.1} parent=11 // pred_check_branch
          %190 = sbr.rel (%p188) target = $region20
        $region19: #{tpu_custom_call.1} parent=11 // pred_region
          %192 = vsyncadd [#allocation5], 0
          %s193 = sshll.u32 %s3, 4
          %s194 = int_to_ptr.hbm [resolvable:$true] %s193
          %s195 = sshll.u32 [#allocation4], 4
          %s196 = int_to_ptr.vmem [resolvable:$true] %s195
          %201 = dma.hbm_to_vmem [thread:$0]  %s194, 1024, %s196, [#allocation5], 64, 64, 4
        $region20: #{tpu_custom_call.1} parent=11 // pred_fallthru
          _
        // Predicated region
        $region21: #{tpu_custom_call.1} parent=11 // pred_check
          %p202 = pneg %p144
        $region22: #{tpu_custom_call.1} parent=11 // pred_check_branch
          %204 = sbr.rel (%p202) target = $region24
        $region23: #{tpu_custom_call.1} parent=11 // pred_region
          _
        $region24: #{tpu_custom_call.1} parent=11 // pred_fallthru
          _
      $region12: #{tpu_custom_call.1} parent=5 // pred_fallthru
        _
      %p205 = scmp.lt.s32.totalorder %s15, 4
      // Predicated region
      $region25: #{tpu_custom_call.1} parent=5 // pred_check
        %p206 = pneg %p205
      $region26: #{tpu_custom_call.1} parent=5 // pred_check_branch
        %208 = sbr.rel (%p206) target = $region28
      $region27: #{tpu_custom_call.1} parent=5 // pred_region
        // Predicated region
        $region29: #{tpu_custom_call.1} parent=27 // pred_check
          %p209 = pneg %p49
        $region30: #{tpu_custom_call.1} parent=27 // pred_check_branch
          %211 = sbr.rel (%p209) target = $region32
        $region31: #{tpu_custom_call.1} parent=27 // pred_region
          %s212 = sand.u32 %s39, 1
          %s213 = sand.u32 %s39, 1
          %s214 = smul.addr %s213, 32
          %s215 = scalar_lea.vmem [#allocation3], %s214
          %s216 = smul.u32 4, %s22
          %s217 = smul.addr %s216, 2
          %s218 = sadd.s32 %s23, %s217
          %s219 = smul.addr %s218, 8
          %s220 = scalar_lea.vmem %s0, %s219
          // Predicated region
          $region33: #{tpu_custom_call.1} parent=31 // pred_check
            _
          $region34: #{tpu_custom_call.1} parent=31 // pred_check_branch
            %222 = sbr.rel (0) target = $region36
          $region35: #{tpu_custom_call.1} parent=31 // pred_region
            // Predicated region
            $region37: #{tpu_custom_call.1} parent=35 // pred_check
              _
            $region38: #{tpu_custom_call.1} parent=35 // pred_check_branch
              %224 = sbr.rel (0) target = $region40
            $region39: #{tpu_custom_call.1} parent=35 // pred_region
              // Predicated region
              $region52: #{tpu_custom_call.1} parent=39 // pred_check
                _
              $region53: #{tpu_custom_call.1} parent=39 // pred_check_branch
                %246 = sbr.rel (0) target = $region55
              $region54: #{tpu_custom_call.1} parent=39 // pred_region
                loop: start=0, step=1, limit=1
                $region56: #{tpu_custom_call.1} parent=54 // loop_pre_header
                  _
                $region57: #{tpu_custom_call.1} parent=54 // loop_header
                  %s248 = sphi 0, %s252
                  %p249 = scmp.ge.s32.totalorder %s248, 1
                  %s253 = sphi %s220, %s220
                  %s254 = sphi %s215, %s215
                $region58: #{tpu_custom_call.1} parent=54 // loop_header_branch
                  %251 = sbr.rel (%p249) target = $region62
                $region59: #{tpu_custom_call.1} parent=54 // loop_body
                  %v255 = vld [vmem:[%s253] sm:$0xff]
                  %256 = vst [vmem:[%s254] sm:$0xff] %v255
                  %v257 = vld [vmem:[%s253 + $0x10] sm:$0xff]
                  %258 = vst [vmem:[%s254 + $0x8] sm:$0xff] %v257
                  %v259 = vld [vmem:[%s253 + $0x20] sm:$0xff]
                  %260 = vst [vmem:[%s254 + $0x10] sm:$0xff] %v259
                  %v261 = vld [vmem:[%s253 + $0x30] sm:$0xff]
                  %262 = vst [vmem:[%s254 + $0x18] sm:$0xff] %v261
                $region60: #{tpu_custom_call.1} parent=54 // loop_footer
                  %s252 = sadd.s32 1, %s248
                $region61: #{tpu_custom_call.1} parent=54 // loop_footer_branch
                  %247 = sbr.rel target = $region57
                $region62: #{tpu_custom_call.1} parent=54 // loop_exit
                  _
              $region55: #{tpu_custom_call.1} parent=39 // pred_fallthru
                _
              // Predicated region
              $region63: #{tpu_custom_call.1} parent=39 // pred_check
                _
              $region64: #{tpu_custom_call.1} parent=39 // pred_check_branch
                %264 = sbr.rel target = $region66
              $region65: #{tpu_custom_call.1} parent=39 // pred_region
                _
              $region66: #{tpu_custom_call.1} parent=39 // pred_fallthru
                _
            $region40: #{tpu_custom_call.1} parent=35 // pred_fallthru
              _
            // Predicated region
            $region41: #{tpu_custom_call.1} parent=35 // pred_check
              _
            $region42: #{tpu_custom_call.1} parent=35 // pred_check_branch
              %226 = sbr.rel target = $region44
            $region43: #{tpu_custom_call.1} parent=35 // pred_region
              %s228 = ssub.s32 256, 1
              loop: start=0, step=1, limit=1
              $region45: #{tpu_custom_call.1} parent=43 // loop_pre_header
                _
              $region46: #{tpu_custom_call.1} parent=43 // loop_header
                %s230 = sphi 0, %s234
                %p231 = scmp.ge.s32.totalorder %s230, 1
                %s235 = sphi %s220, %s220
                %s236 = sphi %s215, %s215
              $region47: #{tpu_custom_call.1} parent=43 // loop_header_branch
                %233 = sbr.rel (%p231) target = $region51
              $region48: #{tpu_custom_call.1} parent=43 // loop_body
                %v237 = vld [vmem:[%s235] sm:%s228]
                %238 = vst [vmem:[%s236] sm:%s228] %v237
                %v239 = vld [vmem:[%s235 + $0x10] sm:%s228]
                %240 = vst [vmem:[%s236 + $0x8] sm:%s228] %v239
                %v241 = vld [vmem:[%s235 + $0x20] sm:%s228]
                %242 = vst [vmem:[%s236 + $0x10] sm:%s228] %v241
                %v243 = vld [vmem:[%s235 + $0x30] sm:%s228]
                %244 = vst [vmem:[%s236 + $0x18] sm:%s228] %v243
              $region49: #{tpu_custom_call.1} parent=43 // loop_footer
                %s234 = sadd.s32 1, %s230
              $region50: #{tpu_custom_call.1} parent=43 // loop_footer_branch
                %229 = sbr.rel target = $region46
              $region51: #{tpu_custom_call.1} parent=43 // loop_exit
                _
            $region44: #{tpu_custom_call.1} parent=35 // pred_fallthru
              _
          $region36: #{tpu_custom_call.1} parent=31 // pred_fallthru
            _
          %265 = vnop
        $region32: #{tpu_custom_call.1} parent=27 // pred_fallthru
          _
        // Predicated region
        $region67: #{tpu_custom_call.1} parent=27 // pred_check
          %p266 = pneg %p96
        $region68: #{tpu_custom_call.1} parent=27 // pred_check_branch
          %268 = sbr.rel (%p266) target = $region70
        $region69: #{tpu_custom_call.1} parent=27 // pred_region
          %s269 = smul.u32 16, %s22
          %p270 = scmp.lt.s32.totalorder %s269, 31
          %s271 = scalar_select %p270, %s269, 31
          %s272 = smul.addr %s271, 8
          %s273 = scalar_lea.vmem %s2, %s272
          %s274 = smul.u32 16, %s22
        $region70: #{tpu_custom_call.1} parent=27 // pred_fallthru
          _
      $region28: #{tpu_custom_call.1} parent=5 // pred_fallthru
        _
      %p275 = scmp.le.s32.totalorder 1, %s15
      %p276 = scmp.lt.s32.totalorder %s15, 5
      %p277 = pnand %p275, %p276
      %p278 = pneg %p277
      // Predicated region
      $region71: #{tpu_custom_call.1} parent=5 // pred_check
        _
      $region72: #{tpu_custom_call.1} parent=5 // pred_check_branch
        %280 = sbr.rel (%p277) target = $region74
      $region73: #{tpu_custom_call.1} parent=5 // pred_region
        %s281 = ssub.s32 %s15, 1
        %s282 = sand.u32 %s42, 1
        %s283 = sand.u32 %s42, 1
        %s284 = smul.addr %s283, 32
        %s285 = scalar_lea.vmem [#allocation3], %s284
        // Predicated region
        $region75: #{tpu_custom_call.1} parent=73 // pred_check
          %p286 = pneg %p55
        $region76: #{tpu_custom_call.1} parent=73 // pred_check_branch
          %288 = sbr.rel (%p286) target = $region78
        $region77: #{tpu_custom_call.1} parent=73 // pred_region
          _
        $region78: #{tpu_custom_call.1} parent=73 // pred_fallthru
          _
        // Predicated region
        $region79: #{tpu_custom_call.1} parent=73 // pred_check
          %p289 = pneg %p123
        $region80: #{tpu_custom_call.1} parent=73 // pred_check_branch
          %291 = sbr.rel (%p289) target = $region82
        $region81: #{tpu_custom_call.1} parent=73 // pred_region
          %293 = dma.done [#allocation5], 1024
        $region82: #{tpu_custom_call.1} parent=73 // pred_fallthru
          _
        %s294 = sand.u32 %s42, 1
        %s295 = sand.u32 %s42, 1
        %s296 = smul.addr %s295, 32
        %s297 = scalar_lea.vmem [#allocation3], %s296
        %p298 = pneg %p55
        %p299 = pneg %p52
        %p300 = pneg %p76
        %p301 = pneg %p73
        %s302 = smul.u32 16, %s24
        %p303 = scmp.lt.s32.totalorder %s302, 31
        %s304 = scalar_select %p303, %s302, 31
        %s305 = smul.addr %s304, 8
        %s306 = scalar_lea.vmem %s2, %s305
        %p307 = pneg %p102
        %p308 = pneg %p99
        %p309 = pneg %p123
        %p310 = pneg %p120
        %p311 = pneg %p144
        %p312 = pneg %p141
        %p313 = pneg %p170
        %p314 = pneg %p167
        %s315 = sand.u32 %s157, 1
        %s316 = scalar_lea.sflag [#allocation6], %s315
        %s317 = sand.u32 %s157, 1
        %s318 = smul.addr %s317, 64
        %s319 = scalar_lea.vmem [#allocation7], %s318
        %s320 = smul.u32 4, %s24
        %s321 = smul.u32 16, %s24
        %p322 = scmp.lt.s32.totalorder %s321, 31
        %s323 = scalar_select %p322, %s321, 31
        %s324 = smul.addr %s323, 8
        %s325 = scalar_lea.vmem %s2, %s324
        %s326 = smul.u32 16, %s24
        %s327 = smul.u32 16, %s24
        %p328 = scmp.eq.s32.totalorder %s25, 0
        // Predicated region
        $region83: #{tpu_custom_call.1} parent=73 // pred_check
          %p329 = pneg %p328
        $region84: #{tpu_custom_call.1} parent=73 // pred_check_branch
          %331 = sbr.rel (%p329) target = $region86
        $region85: #{tpu_custom_call.1} parent=73 // pred_region
          %332 = vst [vmem:[#allocation2] sm:$0xff] 0.0
          %333 = vst [vmem:[#allocation2 + $0x8] sm:$0xff] 0.0
          %334 = vst [vmem:[#allocation2 + $0x10] sm:$0xff] 0.0
          %335 = vst [vmem:[#allocation2 + $0x18] sm:$0xff] 0.0
          %336 = vst [vmem:[#allocation2 + $0x20] sm:$0xff] 0.0
          %337 = vst [vmem:[#allocation2 + $0x28] sm:$0xff] 0.0
          %338 = vst [vmem:[#allocation2 + $0x30] sm:$0xff] 0.0
          %339 = vst [vmem:[#allocation2 + $0x38] sm:$0xff] 0.0
          %340 = vst [vmem:[#allocation2 + $0x40] sm:$0xff] 0.0
          %341 = vst [vmem:[#allocation2 + $0x48] sm:$0xff] 0.0
          %342 = vst [vmem:[#allocation2 + $0x50] sm:$0xff] 0.0
          %343 = vst [vmem:[#allocation2 + $0x58] sm:$0xff] 0.0
          %344 = vst [vmem:[#allocation2 + $0x60] sm:$0xff] 0.0
          %345 = vst [vmem:[#allocation2 + $0x68] sm:$0xff] 0.0
          %346 = vst [vmem:[#allocation2 + $0x70] sm:$0xff] 0.0
          %347 = vst [vmem:[#allocation2 + $0x78] sm:$0xff] 0.0
        $region86: #{tpu_custom_call.1} parent=73 // pred_fallthru
          _
        %v348 = vld [vmem:[%s285] sm:$0xff]
        %v349 = vld [vmem:[%s285 + $0x8] sm:$0xff]
        %v350 = vld [vmem:[%s285 + $0x10] sm:$0xff]
        %v351 = vld [vmem:[%s285 + $0x18] sm:$0xff]
        %v352 = vunpack.c.0.s8 %v348
        %v353 = vunpack.c.1.s8 %v348
        %v354 = vunpack.c.2.s8 %v348
        %v355 = vunpack.c.3.s8 %v348
        %v356 = vunpack.c.0.s8 %v349
        %v357 = vunpack.c.1.s8 %v349
        %v358 = vunpack.c.2.s8 %v349
        %v359 = vunpack.c.3.s8 %v349
        %v360 = vunpack.c.0.s8 %v350
        %v361 = vunpack.c.1.s8 %v350
        %v362 = vunpack.c.2.s8 %v350
        %v363 = vunpack.c.3.s8 %v350
        %v364 = vunpack.c.0.s8 %v351
        %v365 = vunpack.c.1.s8 %v351
        %v366 = vunpack.c.2.s8 %v351
        %v367 = vunpack.c.3.s8 %v351
        %v368 = vcvt.s32.f32 %v352
        %v369 = vcvt.s32.f32 %v353
        %v370 = vcvt.s32.f32 %v354
        %v371 = vcvt.s32.f32 %v355
        %v372 = vcvt.s32.f32 %v356
        %v373 = vcvt.s32.f32 %v357
        %v374 = vcvt.s32.f32 %v358
        %v375 = vcvt.s32.f32 %v359
        %v376 = vcvt.s32.f32 %v360
        %v377 = vcvt.s32.f32 %v361
        %v378 = vcvt.s32.f32 %v362
        %v379 = vcvt.s32.f32 %v363
        %v380 = vcvt.s32.f32 %v364
        %v381 = vcvt.s32.f32 %v365
        %v382 = vcvt.s32.f32 %v366
        %v383 = vcvt.s32.f32 %v367
        %v384 = vpack.c.bf16 %v369, %v368
        %v385 = vpack.c.bf16 %v371, %v370
        %v386 = vpack.c.bf16 %v373, %v372
        %v387 = vpack.c.bf16 %v375, %v374
        %v388 = vpack.c.bf16 %v377, %v376
        %v389 = vpack.c.bf16 %v379, %v378
        %v390 = vpack.c.bf16 %v381, %v380
        %v391 = vpack.c.bf16 %v383, %v382
        %s392 = smul.u32 %s25, 128
        %s393 = sshra.s32 %s392, 3
        %s394 = sand.u32 %s392, 7
        %s395 = smul.addr %s393, 4
        %s396 = scalar_lea.vmem %s1, %s395
        %v397 = vld [vmem:[%s396] sm:$0xf]
        %v398 = vld [vmem:[%s396 + $0x4] sm:$0xf]
        %v399 = vld [vmem:[%s396 + $0x8] sm:$0xf]
        %v400 = vld [vmem:[%s396 + $0xc] sm:$0xf]
        %v401 = vld [vmem:[%s396 + $0x10] sm:$0xf]
        %v402 = vld [vmem:[%s396 + $0x14] sm:$0xf]
        %v403 = vld [vmem:[%s396 + $0x18] sm:$0xf]
        %v404 = vld [vmem:[%s396 + $0x1c] sm:$0xf]
        %v405 = vld [vmem:[%s396 + $0x20] sm:$0xf]
        %v406 = vld [vmem:[%s396 + $0x24] sm:$0xf]
        %v407 = vld [vmem:[%s396 + $0x28] sm:$0xf]
        %v408 = vld [vmem:[%s396 + $0x2c] sm:$0xf]
        %v409 = vld [vmem:[%s396 + $0x30] sm:$0xf]
        %v410 = vld [vmem:[%s396 + $0x34] sm:$0xf]
        %v411 = vld [vmem:[%s396 + $0x38] sm:$0xf]
        %v412 = vld [vmem:[%s396 + $0x3c] sm:$0xf]
        %v413 = vld [vmem:[#allocation2] sm:$0xff]
        %v414 = vld [vmem:[#allocation2 + $0x8] sm:$0xff]
        %v415 = vld [vmem:[#allocation2 + $0x10] sm:$0xff]
        %v416 = vld [vmem:[#allocation2 + $0x18] sm:$0xff]
        %v417 = vld [vmem:[#allocation2 + $0x20] sm:$0xff]
        %v418 = vld [vmem:[#allocation2 + $0x28] sm:$0xff]
        %v419 = vld [vmem:[#allocation2 + $0x30] sm:$0xff]
        %v420 = vld [vmem:[#allocation2 + $0x38] sm:$0xff]
        %v421 = vld [vmem:[#allocation2 + $0x40] sm:$0xff]
        %v422 = vld [vmem:[#allocation2 + $0x48] sm:$0xff]
        %v423 = vld [vmem:[#allocation2 + $0x50] sm:$0xff]
        %v424 = vld [vmem:[#allocation2 + $0x58] sm:$0xff]
        %v425 = vld [vmem:[#allocation2 + $0x60] sm:$0xff]
        %v426 = vld [vmem:[#allocation2 + $0x68] sm:$0xff]
        %v427 = vld [vmem:[#allocation2 + $0x70] sm:$0xff]
        %v428 = vld [vmem:[#allocation2 + $0x78] sm:$0xff]
        %v445 = vunpack.c.l.b16 %v397
        %v446 = vunpack.c.l.b16 %v398
        %v447 = vunpack.c.l.b16 %v399
        %v448 = vunpack.c.l.b16 %v400
        %v449 = vunpack.c.l.b16 %v401
        %v450 = vunpack.c.l.b16 %v402
        %v451 = vunpack.c.l.b16 %v403
        %v452 = vunpack.c.l.b16 %v404
        %v453 = vunpack.c.l.b16 %v405
        %v454 = vunpack.c.l.b16 %v406
        %v455 = vunpack.c.l.b16 %v407
        %v456 = vunpack.c.l.b16 %v408
        %v457 = vunpack.c.l.b16 %v409
        %v458 = vunpack.c.l.b16 %v410
        %v459 = vunpack.c.l.b16 %v411
        %v460 = vunpack.c.l.b16 %v412
        %v461 = vpack.c.b16 %v446, %v445
        %v462 = vpack.c.b16 %v448, %v447
        %v463 = vpack.c.b16 %v450, %v449
        %v464 = vpack.c.b16 %v452, %v451
        %v465 = vpack.c.b16 %v454, %v453
        %v466 = vpack.c.b16 %v456, %v455
        %v467 = vpack.c.b16 %v458, %v457
        %v468 = vpack.c.b16 %v460, %v459
        %477 = vmatpush.bf16.msra.mxu0 %v468
        %478 = vmatpush.bf16.msra.mxu0 %v467
        %479 = vmatpush.bf16.msra.mxu0 %v466
        %480 = vmatpush.bf16.msra.mxu0 %v465
        %481 = vmatpush.bf16.msra.mxu0 %v464
        %482 = vmatpush.bf16.msra.mxu0 %v463
        %483 = vmatpush.bf16.msra.mxu0 %v462
        %484 = vmatpush.bf16.msra.mxu0 %v461
        %485 = vmatmul.bf16.gmra.mxu0 %v384
        %v486 = vpop.f32.mrf.mxu0
        %v487 = vadd.f32 0.0, %v486
        %v488 = vpop.f32.mrf.mxu0
        %v489 = vadd.f32 0.0, %v488
        %490 = vmatmul.bf16.gmra.mxu0 %v385
        %v491 = vpop.f32.mrf.mxu0
        %v492 = vadd.f32 0.0, %v491
        %v493 = vpop.f32.mrf.mxu0
        %v494 = vadd.f32 0.0, %v493
        %495 = vmatmul.bf16.gmra.mxu0 %v386
        %v496 = vpop.f32.mrf.mxu0
        %v497 = vadd.f32 0.0, %v496
        %v498 = vpop.f32.mrf.mxu0
        %v499 = vadd.f32 0.0, %v498
        %500 = vmatmul.bf16.gmra.mxu0 %v387
        %v501 = vpop.f32.mrf.mxu0
        %v502 = vadd.f32 0.0, %v501
        %v503 = vpop.f32.mrf.mxu0
        %v504 = vadd.f32 0.0, %v503
        %505 = vmatmul.bf16.gmra.mxu0 %v388
        %v506 = vpop.f32.mrf.mxu0
        %v507 = vadd.f32 0.0, %v506
        %v508 = vpop.f32.mrf.mxu0
        %v509 = vadd.f32 0.0, %v508
        %510 = vmatmul.bf16.gmra.mxu0 %v389
        %v511 = vpop.f32.mrf.mxu0
        %v512 = vadd.f32 0.0, %v511
        %v513 = vpop.f32.mrf.mxu0
        %v514 = vadd.f32 0.0, %v513
        %515 = vmatmul.bf16.gmra.mxu0 %v390
        %v516 = vpop.f32.mrf.mxu0
        %v517 = vadd.f32 0.0, %v516
        %v518 = vpop.f32.mrf.mxu0
        %v519 = vadd.f32 0.0, %v518
        %520 = vmatmul.bf16.gmra.mxu0 %v391
        %v521 = vpop.f32.mrf.mxu0
        %v522 = vadd.f32 0.0, %v521
        %v523 = vpop.f32.mrf.mxu0
        %v524 = vadd.f32 0.0, %v523
        %525 = vdwg.mxu0
        %v526 = vadd.f32 %v413, %v487
        %v527 = vadd.f32 %v414, %v489
        %v528 = vadd.f32 %v415, %v492
        %v529 = vadd.f32 %v416, %v494
        %v530 = vadd.f32 %v417, %v497
        %v531 = vadd.f32 %v418, %v499
        %v532 = vadd.f32 %v419, %v502
        %v533 = vadd.f32 %v420, %v504
        %v534 = vadd.f32 %v421, %v507
        %v535 = vadd.f32 %v422, %v509
        %v536 = vadd.f32 %v423, %v512
        %v537 = vadd.f32 %v424, %v514
        %v538 = vadd.f32 %v425, %v517
        %v539 = vadd.f32 %v426, %v519
        %v540 = vadd.f32 %v427, %v522
        %v541 = vadd.f32 %v428, %v524
        %542 = vst [vmem:[#allocation2] sm:$0xff] %v526
        %543 = vst [vmem:[#allocation2 + $0x8] sm:$0xff] %v527
        %544 = vst [vmem:[#allocation2 + $0x10] sm:$0xff] %v528
        %545 = vst [vmem:[#allocation2 + $0x18] sm:$0xff] %v529
        %546 = vst [vmem:[#allocation2 + $0x20] sm:$0xff] %v530
        %547 = vst [vmem:[#allocation2 + $0x28] sm:$0xff] %v531
        %548 = vst [vmem:[#allocation2 + $0x30] sm:$0xff] %v532
        %549 = vst [vmem:[#allocation2 + $0x38] sm:$0xff] %v533
        %550 = vst [vmem:[#allocation2 + $0x40] sm:$0xff] %v534
        %551 = vst [vmem:[#allocation2 + $0x48] sm:$0xff] %v535
        %552 = vst [vmem:[#allocation2 + $0x50] sm:$0xff] %v536
        %553 = vst [vmem:[#allocation2 + $0x58] sm:$0xff] %v537
        %554 = vst [vmem:[#allocation2 + $0x60] sm:$0xff] %v538
        %555 = vst [vmem:[#allocation2 + $0x68] sm:$0xff] %v539
        %556 = vst [vmem:[#allocation2 + $0x70] sm:$0xff] %v540
        %557 = vst [vmem:[#allocation2 + $0x78] sm:$0xff] %v541
        %p558 = scmp.eq.s32.totalorder %s25, 1
        // Predicated region
        $region87: #{tpu_custom_call.1} parent=73 // pred_check
          %p559 = pneg %p558
        $region88: #{tpu_custom_call.1} parent=73 // pred_check_branch
          %561 = sbr.rel (%p559) target = $region90
        $region89: #{tpu_custom_call.1} parent=73 // pred_region
          %v562 = vld [vmem:[#allocation2] sm:$0xff]
          %v563 = vld [vmem:[#allocation2 + $0x8] sm:$0xff]
          %v564 = vld [vmem:[#allocation2 + $0x10] sm:$0xff]
          %v565 = vld [vmem:[#allocation2 + $0x18] sm:$0xff]
          %v566 = vld [vmem:[#allocation2 + $0x20] sm:$0xff]
          %v567 = vld [vmem:[#allocation2 + $0x28] sm:$0xff]
          %v568 = vld [vmem:[#allocation2 + $0x30] sm:$0xff]
          %v569 = vld [vmem:[#allocation2 + $0x38] sm:$0xff]
          %v570 = vld [vmem:[#allocation2 + $0x40] sm:$0xff]
          %v571 = vld [vmem:[#allocation2 + $0x48] sm:$0xff]
          %v572 = vld [vmem:[#allocation2 + $0x50] sm:$0xff]
          %v573 = vld [vmem:[#allocation2 + $0x58] sm:$0xff]
          %v574 = vld [vmem:[#allocation2 + $0x60] sm:$0xff]
          %v575 = vld [vmem:[#allocation2 + $0x68] sm:$0xff]
          %v576 = vld [vmem:[#allocation2 + $0x70] sm:$0xff]
          %v577 = vld [vmem:[#allocation2 + $0x78] sm:$0xff]
          %v578 = vld [vmem:[%s325] sm:$0xff]
          %v579 = vld [vmem:[%s325 + $0x8] sm:$0xff]
          %v580 = vld [vmem:[%s325 + $0x10] sm:$0xff]
          %v581 = vld [vmem:[%s325 + $0x18] sm:$0xff]
          %v582 = vld [vmem:[%s325 + $0x20] sm:$0xff]
          %v583 = vld [vmem:[%s325 + $0x28] sm:$0xff]
          %v584 = vld [vmem:[%s325 + $0x30] sm:$0xff]
          %v585 = vld [vmem:[%s325 + $0x38] sm:$0xff]
          %v586 = vld [vmem:[%s325 + $0x40] sm:$0xff]
          %v587 = vld [vmem:[%s325 + $0x48] sm:$0xff]
          %v588 = vld [vmem:[%s325 + $0x50] sm:$0xff]
          %v589 = vld [vmem:[%s325 + $0x58] sm:$0xff]
          %v590 = vld [vmem:[%s325 + $0x60] sm:$0xff]
          %v591 = vld [vmem:[%s325 + $0x68] sm:$0xff]
          %v592 = vld [vmem:[%s325 + $0x70] sm:$0xff]
          %v593 = vld [vmem:[%s325 + $0x78] sm:$0xff]
          %595 = vset.pattern.permute.xlu0 0
          %596 = vperm.xlu0 %595, %v578
          %v597 = vpop.permute.xlu0 %596
          %600 = vset.pattern.permute.xlu0 0
          %601 = vperm.xlu0 %600, %v579
          %v602 = vpop.permute.xlu0 %601
          %605 = vset.pattern.permute.xlu0 0
          %606 = vperm.xlu0 %605, %v580
          %v607 = vpop.permute.xlu0 %606
          %610 = vset.pattern.permute.xlu0 0
          %611 = vperm.xlu0 %610, %v581
          %v612 = vpop.permute.xlu0 %611
          %615 = vset.pattern.permute.xlu0 0
          %616 = vperm.xlu0 %615, %v582
          %v617 = vpop.permute.xlu0 %616
          %620 = vset.pattern.permute.xlu0 0
          %621 = vperm.xlu0 %620, %v583
          %v622 = vpop.permute.xlu0 %621
          %625 = vset.pattern.permute.xlu0 0
          %626 = vperm.xlu0 %625, %v584
          %v627 = vpop.permute.xlu0 %626
          %630 = vset.pattern.permute.xlu0 0
          %631 = vperm.xlu0 %630, %v585
          %v632 = vpop.permute.xlu0 %631
          %635 = vset.pattern.permute.xlu0 0
          %636 = vperm.xlu0 %635, %v586
          %v637 = vpop.permute.xlu0 %636
          %640 = vset.pattern.permute.xlu0 0
          %641 = vperm.xlu0 %640, %v587
          %v642 = vpop.permute.xlu0 %641
          %645 = vset.pattern.permute.xlu0 0
          %646 = vperm.xlu0 %645, %v588
          %v647 = vpop.permute.xlu0 %646
          %650 = vset.pattern.permute.xlu0 0
          %651 = vperm.xlu0 %650, %v589
          %v652 = vpop.permute.xlu0 %651
          %655 = vset.pattern.permute.xlu0 0
          %656 = vperm.xlu0 %655, %v590
          %v657 = vpop.permute.xlu0 %656
          %660 = vset.pattern.permute.xlu0 0
          %661 = vperm.xlu0 %660, %v591
          %v662 = vpop.permute.xlu0 %661
          %665 = vset.pattern.permute.xlu0 0
          %666 = vperm.xlu0 %665, %v592
          %v667 = vpop.permute.xlu0 %666
          %670 = vset.pattern.permute.xlu0 0
          %671 = vperm.xlu0 %670, %v593
          %v672 = vpop.permute.xlu0 %671
          %v674 = vmul.f32 %v562, %v597
          %v675 = vmul.f32 %v563, %v602
          %v676 = vmul.f32 %v564, %v607
          %v677 = vmul.f32 %v565, %v612
          %v678 = vmul.f32 %v566, %v617
          %v679 = vmul.f32 %v567, %v622
          %v680 = vmul.f32 %v568, %v627
          %v681 = vmul.f32 %v569, %v632
          %v682 = vmul.f32 %v570, %v637
          %v683 = vmul.f32 %v571, %v642
          %v684 = vmul.f32 %v572, %v647
          %v685 = vmul.f32 %v573, %v652
          %v686 = vmul.f32 %v574, %v657
          %v687 = vmul.f32 %v575, %v662
          %v688 = vmul.f32 %v576, %v667
          %v689 = vmul.f32 %v577, %v672
          %v690 = vpack.c.bf16 %v675, %v674
          %v691 = vpack.c.bf16 %v677, %v676
          %v692 = vpack.c.bf16 %v679, %v678
          %v693 = vpack.c.bf16 %v681, %v680
          %v694 = vpack.c.bf16 %v683, %v682
          %v695 = vpack.c.bf16 %v685, %v684
          %v696 = vpack.c.bf16 %v687, %v686
          %v697 = vpack.c.bf16 %v689, %v688
          %v698 = vld [vmem:[#allocation4] sm:$0xf]
          %v699 = vld [vmem:[#allocation4 + $0x4] sm:$0xf]
          %v700 = vld [vmem:[#allocation4 + $0x8] sm:$0xf]
          %v701 = vld [vmem:[#allocation4 + $0xc] sm:$0xf]
          %v702 = vld [vmem:[#allocation4 + $0x10] sm:$0xf]
          %v703 = vld [vmem:[#allocation4 + $0x14] sm:$0xf]
          %v704 = vld [vmem:[#allocation4 + $0x18] sm:$0xf]
          %v705 = vld [vmem:[#allocation4 + $0x1c] sm:$0xf]
          %v706 = vld [vmem:[#allocation4 + $0x20] sm:$0xf]
          %v707 = vld [vmem:[#allocation4 + $0x24] sm:$0xf]
          %v708 = vld [vmem:[#allocation4 + $0x28] sm:$0xf]
          %v709 = vld [vmem:[#allocation4 + $0x2c] sm:$0xf]
          %v710 = vld [vmem:[#allocation4 + $0x30] sm:$0xf]
          %v711 = vld [vmem:[#allocation4 + $0x34] sm:$0xf]
          %v712 = vld [vmem:[#allocation4 + $0x38] sm:$0xf]
          %v713 = vld [vmem:[#allocation4 + $0x3c] sm:$0xf]
          %v714 = vld [vmem:[%s4] sm:$0x1]
          %v716 = vperm.slane %v714, 0
          %v734 = vunpack.c.l.b16 %v698
          %v735 = vunpack.c.l.b16 %v699
          %v736 = vunpack.c.l.b16 %v700
          %v737 = vunpack.c.l.b16 %v701
          %v738 = vunpack.c.l.b16 %v702
          %v739 = vunpack.c.l.b16 %v703
          %v740 = vunpack.c.l.b16 %v704
          %v741 = vunpack.c.l.b16 %v705
          %v742 = vunpack.c.l.b16 %v706
          %v743 = vunpack.c.l.b16 %v707
          %v744 = vunpack.c.l.b16 %v708
          %v745 = vunpack.c.l.b16 %v709
          %v746 = vunpack.c.l.b16 %v710
          %v747 = vunpack.c.l.b16 %v711
          %v748 = vunpack.c.l.b16 %v712
          %v749 = vunpack.c.l.b16 %v713
          %v750 = vpack.c.b16 %v735, %v734
          %v751 = vpack.c.b16 %v737, %v736
          %v752 = vpack.c.b16 %v739, %v738
          %v753 = vpack.c.b16 %v741, %v740
          %v754 = vpack.c.b16 %v743, %v742
          %v755 = vpack.c.b16 %v745, %v744
          %v756 = vpack.c.b16 %v747, %v746
          %v757 = vpack.c.b16 %v749, %v748
          %766 = vmatpush.bf16.msra.mxu0 %v757
          %767 = vmatpush.bf16.msra.mxu0 %v756
          %768 = vmatpush.bf16.msra.mxu0 %v755
          %769 = vmatpush.bf16.msra.mxu0 %v754
          %770 = vmatpush.bf16.msra.mxu0 %v753
          %771 = vmatpush.bf16.msra.mxu0 %v752
          %772 = vmatpush.bf16.msra.mxu0 %v751
          %773 = vmatpush.bf16.msra.mxu0 %v750
          %774 = vmatmul.bf16.gmra.mxu0 %v690
          %v775 = vpop.f32.mrf.mxu0
          %v776 = vadd.f32 %v716, %v775
          %v777 = vpop.f32.mrf.mxu0
          %v778 = vadd.f32 %v716, %v777
          %779 = vmatmul.bf16.gmra.mxu0 %v691
          %v780 = vpop.f32.mrf.mxu0
          %v781 = vadd.f32 %v716, %v780
          %v782 = vpop.f32.mrf.mxu0
          %v783 = vadd.f32 %v716, %v782
          %784 = vmatmul.bf16.gmra.mxu0 %v692
          %v785 = vpop.f32.mrf.mxu0
          %v786 = vadd.f32 %v716, %v785
          %v787 = vpop.f32.mrf.mxu0
          %v788 = vadd.f32 %v716, %v787
          %789 = vmatmul.bf16.gmra.mxu0 %v693
          %v790 = vpop.f32.mrf.mxu0
          %v791 = vadd.f32 %v716, %v790
          %v792 = vpop.f32.mrf.mxu0
          %v793 = vadd.f32 %v716, %v792
          %794 = vmatmul.bf16.gmra.mxu0 %v694
          %v795 = vpop.f32.mrf.mxu0
          %v796 = vadd.f32 %v716, %v795
          %v797 = vpop.f32.mrf.mxu0
          %v798 = vadd.f32 %v716, %v797
          %799 = vmatmul.bf16.gmra.mxu0 %v695
          %v800 = vpop.f32.mrf.mxu0
          %v801 = vadd.f32 %v716, %v800
          %v802 = vpop.f32.mrf.mxu0
          %v803 = vadd.f32 %v716, %v802
          %804 = vmatmul.bf16.gmra.mxu0 %v696
          %v805 = vpop.f32.mrf.mxu0
          %v806 = vadd.f32 %v716, %v805
          %v807 = vpop.f32.mrf.mxu0
          %v808 = vadd.f32 %v716, %v807
          %809 = vmatmul.bf16.gmra.mxu0 %v697
          %v810 = vpop.f32.mrf.mxu0
          %v811 = vadd.f32 %v716, %v810
          %v812 = vpop.f32.mrf.mxu0
          %v813 = vadd.f32 %v716, %v812
          %814 = vdwg.mxu0
          %v815 = vmax.f32 %v776, 0.0
          %v816 = vmax.f32 %v778, 0.0
          %v817 = vmax.f32 %v781, 0.0
          %v818 = vmax.f32 %v783, 0.0
          %v819 = vmax.f32 %v786, 0.0
          %v820 = vmax.f32 %v788, 0.0
          %v821 = vmax.f32 %v791, 0.0
          %v822 = vmax.f32 %v793, 0.0
          %v823 = vmax.f32 %v796, 0.0
          %v824 = vmax.f32 %v798, 0.0
          %v825 = vmax.f32 %v801, 0.0
          %v826 = vmax.f32 %v803, 0.0
          %v827 = vmax.f32 %v806, 0.0
          %v828 = vmax.f32 %v808, 0.0
          %v829 = vmax.f32 %v811, 0.0
          %v830 = vmax.f32 %v813, 0.0
          %v831 = vmul.f32 %v815, %v597
          %v832 = vmul.f32 %v816, %v602
          %v833 = vmul.f32 %v817, %v607
          %v834 = vmul.f32 %v818, %v612
          %v835 = vmul.f32 %v819, %v617
          %v836 = vmul.f32 %v820, %v622
          %v837 = vmul.f32 %v821, %v627
          %v838 = vmul.f32 %v822, %v632
          %v839 = vmul.f32 %v823, %v637
          %v840 = vmul.f32 %v824, %v642
          %v841 = vmul.f32 %v825, %v647
          %v842 = vmul.f32 %v826, %v652
          %v843 = vmul.f32 %v827, %v657
          %v844 = vmul.f32 %v828, %v662
          %v845 = vmul.f32 %v829, %v667
          %v846 = vmul.f32 %v830, %v672
          %v847 = vpack.c.bf16 %v831, %v831
          %v848 = vpack.c.bf16 %v832, %v832
          %v849 = vpack.c.bf16 %v833, %v833
          %v850 = vpack.c.bf16 %v834, %v834
          %v851 = vpack.c.bf16 %v835, %v835
          %v852 = vpack.c.bf16 %v836, %v836
          %v853 = vpack.c.bf16 %v837, %v837
          %v854 = vpack.c.bf16 %v838, %v838
          %v855 = vpack.c.bf16 %v839, %v839
          %v856 = vpack.c.bf16 %v840, %v840
          %v857 = vpack.c.bf16 %v841, %v841
          %v858 = vpack.c.bf16 %v842, %v842
          %v859 = vpack.c.bf16 %v843, %v843
          %v860 = vpack.c.bf16 %v844, %v844
          %v861 = vpack.c.bf16 %v845, %v845
          %v862 = vpack.c.bf16 %v846, %v846
          %863 = vst [vmem:[%s319] sm:$0xf] %v847
          %864 = vst [vmem:[%s319 + $0x4] sm:$0xf] %v848
          %865 = vst [vmem:[%s319 + $0x8] sm:$0xf] %v849
          %866 = vst [vmem:[%s319 + $0xc] sm:$0xf] %v850
          %867 = vst [vmem:[%s319 + $0x10] sm:$0xf] %v851
          %868 = vst [vmem:[%s319 + $0x14] sm:$0xf] %v852
          %869 = vst [vmem:[%s319 + $0x18] sm:$0xf] %v853
          %870 = vst [vmem:[%s319 + $0x1c] sm:$0xf] %v854
          %871 = vst [vmem:[%s319 + $0x20] sm:$0xf] %v855
          %872 = vst [vmem:[%s319 + $0x24] sm:$0xf] %v856
          %873 = vst [vmem:[%s319 + $0x28] sm:$0xf] %v857
          %874 = vst [vmem:[%s319 + $0x2c] sm:$0xf] %v858
          %875 = vst [vmem:[%s319 + $0x30] sm:$0xf] %v859
          %876 = vst [vmem:[%s319 + $0x34] sm:$0xf] %v860
          %877 = vst [vmem:[%s319 + $0x38] sm:$0xf] %v861
          %878 = vst [vmem:[%s319 + $0x3c] sm:$0xf] %v862
        $region90: #{tpu_custom_call.1} parent=73 // pred_fallthru
          _
        %s879 = sand.u32 %s157, 1
        %s880 = scalar_lea.sflag [#allocation6], %s879
        %s881 = sand.u32 %s157, 1
        %s882 = smul.addr %s881, 64
        %s883 = scalar_lea.vmem [#allocation7], %s882
        // Predicated region
        $region91: #{tpu_custom_call.1} parent=73 // pred_check
          %p884 = pneg %p167
        $region92: #{tpu_custom_call.1} parent=73 // pred_check_branch
          %886 = sbr.rel (%p884) target = $region94
        $region93: #{tpu_custom_call.1} parent=73 // pred_region
          %s887 = smul.u32 16, %s24
          %889 = vsyncadd %s880, 0
          %s890 = smul.addr %s887, 4
          %s891 = scalar_lea.hbm %s5, %s890
          %s892 = sshll.u32 %s883, 4
          %s893 = int_to_ptr.vmem [resolvable:$true] %s892
          %s894 = sshll.u32 %s891, 4
          %s895 = int_to_ptr.hbm [resolvable:$true] %s894
          %900 = dma.vmem_to_hbm [thread:$0]  %s893, 1024, %s895, %s880, 64, 64, 4
        $region94: #{tpu_custom_call.1} parent=73 // pred_fallthru
          _
      $region74: #{tpu_custom_call.1} parent=5 // pred_fallthru
        _
      %p901 = scmp.le.s32.totalorder 2, %s15
      // Predicated region
      $region95: #{tpu_custom_call.1} parent=5 // pred_check
        %p902 = pneg %p901
      $region96: #{tpu_custom_call.1} parent=5 // pred_check_branch
        %904 = sbr.rel (%p902) target = $region98
      $region97: #{tpu_custom_call.1} parent=5 // pred_region
        %s905 = ssub.s32 %s15, 2
        // Predicated region
        $region99: #{tpu_custom_call.1} parent=97 // pred_check
          %p906 = pneg %p173
        $region100: #{tpu_custom_call.1} parent=97 // pred_check_branch
          %908 = sbr.rel (%p906) target = $region102
        $region101: #{tpu_custom_call.1} parent=97 // pred_region
          %s909 = sand.u32 %s158, 1
          %s910 = scalar_lea.sflag [#allocation6], %s909
          %s911 = sand.u32 %s158, 1
          %s912 = smul.addr %s911, 64
          %s913 = scalar_lea.vmem [#allocation7], %s912
          %915 = dma.done %s910, 1024
        $region102: #{tpu_custom_call.1} parent=97 // pred_fallthru
          _
      $region98: #{tpu_custom_call.1} parent=5 // pred_fallthru
        _
    $region6: #{tpu_custom_call.1} parent=1 // loop_footer
      %s19 = sadd.s32 1, %s15
    $region7: #{tpu_custom_call.1} parent=1 // loop_footer_branch
      %14 = sbr.rel target = $region3
    $region8: #{tpu_custom_call.1} parent=1 // loop_exit
      _
    %916 = vsyncpa [#allocation5], 1
    %s917 = scalar_lea.sflag [#allocation5], 1
    %918 = vsyncpa %s917, 1
    %919 = vsyncpa [#allocation6], 1
    %s920 = scalar_lea.sflag [#allocation6], 1
    %921 = vsyncpa %s920, 1

</llo_original>
